<compile_context>
chip_gen: v6e
topology: v6e:2x2x1
jax: 0.10.0
libtpu: 0.0.40
codegen_flags: <defaults>
</compile_context>

<pallas_src>
import jax
import jax.numpy as jnp
from jax.experimental import pallas as pl
from jax.experimental.pallas import tpu as pltpu

_LANE = 128
_SMALL_N = 2048  # below this, plain fused XLA beats pallas_call fixed overhead


def _tanh_dup4_kernel(x_ref, o_ref):
    # x_ref: (tr, 128) tile of the unique (deduplicated) flattened input.
    # o_ref: (4, tr, 128) — same tile position in each of the 4 output copies.
    # Transcendentals in f32 (matters for bf16 inputs on v5e; EUP, not VALU).
    z = jnp.tanh(jnp.tanh(x_ref[...].astype(jnp.float32))).astype(o_ref.dtype)
    for k in range(4):  # 4 full-tile, lane-aligned (unmasked) stores
        o_ref[k] = z


def _sublane_multiple(dtype):
    # minimum sublane granularity: 8 for 4-byte, 16 for 2-byte, 32 for 1-byte
    return max(8, 32 // jnp.dtype(dtype).itemsize)


def _round_up(a, b):
    return pl.cdiv(a, b) * b


def model_forward(x, *, target_tile_bytes=1 << 20):
    # torch.cat([x[:1], x], dim=1) is only shape-valid when batch == 1.
    assert x.shape[0] == 1, "torch.cat([x[:1], x], dim=1) requires batch size 1"

    dtype = x.dtype
    n = int(x.size)                       # unique element count
    f = x.reshape(-1)                     # free reshape: unique elements only

    # Tiny inputs: fused XLA elementwise + tile is as fast as (or faster than)
    # a pallas_call and avoids the pad/strip path entirely.
    if n < _SMALL_N:
        z = jnp.tanh(jnp.tanh(f.astype(jnp.float32))).astype(dtype)
        return jnp.tile(z, 4).reshape(1, 4 * n)

    itemsize = jnp.dtype(dtype).itemsize
    sub = _sublane_multiple(dtype)

    # Constant-byte tiles: ~target_tile_bytes of *input* per tile, whatever
    # the dtype (bf16 -> 2x the rows of f32, etc.).
    target_tr = max(sub, (target_tile_bytes // (_LANE * itemsize)) // sub * sub)

    # Bound padding: round rows only to the sublane multiple, then split the
    # rows across the grid (padding < grid*sub rows, not up to a full tile).
    rows_min = _round_up(pl.cdiv(n, _LANE), sub)
    min_grid = 2 if rows_min >= 2 * sub else 1      # keep the pipeline double-buffered
    grid = max(min_grid, pl.cdiv(rows_min, target_tr))
    tr = _round_up(pl.cdiv(rows_min, grid), sub)
    rows = grid * tr
    n_pad = rows * _LANE

    if n_pad != n:
        # TODO(synk): a masked tail store inside the kernel would avoid this
        # wrapper-side pad copy (and the strip slice below) for large
        # lane-unaligned inputs.
        f = jnp.pad(f, (0, n_pad - n))
    f2 = f.reshape(rows, _LANE)

    # Double-buffered VMEM footprint: 2 x (1 input tile + 4 output copies).
    tile_in_bytes = tr * _LANE * itemsize
    vmem_limit = int(min(128 << 20, max(16 << 20, 10 * tile_in_bytes + (2 << 20))))

    out4 = pl.pallas_call(
        _tanh_dup4_kernel,
        out_shape=jax.ShapeDtypeStruct((4, rows, _LANE), dtype),
        grid=(grid,),
        in_specs=[pl.BlockSpec((tr, _LANE), lambda i: (i, 0))],
        out_specs=pl.BlockSpec((4, tr, _LANE), lambda i: (0, i, 0)),
        compiler_params=pltpu.CompilerParams(
            # embarrassingly parallel over row tiles
            dimension_semantics=("parallel",),
            vmem_limit_bytes=vmem_limit),
        cost_estimate=pl.CostEstimate(
            flops=0,
            transcendentals=2 * n_pad,
            bytes_accessed=5 * n_pad * itemsize),
    )(f2)

    # (4, rows, 128) -> (4, n_pad): row-major flatten of each copy == flat(z);
    # strip padding (only for lane-unaligned sizes) and lay the 4 copies out
    # contiguously along dim 1.
    out = out4.reshape(4, n_pad)
    if n_pad != n:
        out = out[:, :n]
    return out.reshape(1, 4 * n)


def _reference(x):
    y = jnp.concatenate([x[:1], x], axis=1)
    y = y.reshape(y.shape[0], -1)
    y = jnp.tanh(y)
    y = jnp.concatenate([y, y], axis=1)
    return jnp.tanh(y)


if __name__ == "__main__":
    key = jax.random.PRNGKey(0)
    k1, k2, k3, k4 = jax.random.split(key, 4)

    tests = [
        # (input, kwargs, atol) -------------------------------------------
        # tiny, spec-like shape (module used dim1=3, dim2=4): XLA fallback path
        (jax.random.normal(k1, (1, 3, 4), dtype=jnp.float32), {}, 1e-6),
        # lane/sublane-aligned, forced multi-tile grid (small tile for test)
        (jax.random.normal(k2, (1, 64, 128), dtype=jnp.float32),
         {"target_tile_bytes": 16 * 1024}, 1e-6),
        # lane-unaligned mid-size: exercises bounded pad + strip path
        (jax.random.normal(k3, (1, 100, 257), dtype=jnp.float32), {}, 1e-6),
        # bf16: dtype-aware sublane multiple / tile sizing (f32 internal math)
        (jax.random.normal(k4, (1, 32, 128), dtype=jnp.bfloat16), {}, 2e-2),
    ]

    for x, kwargs, atol in tests:
        out = jax.block_until_ready(model_forward(x, **kwargs))
        ref = _reference(x)
        assert out.shape == ref.shape, (out.shape, ref.shape)
        assert jnp.allclose(out.astype(jnp.float32), ref.astype(jnp.float32),
                            atol=atol, rtol=1e-6), f"mismatch for shape {x.shape}"

    print("KERNEL_OK")
</pallas_src>

<mosaic_0001>
module attributes {stable_mosaic.version = 11 : i64} {
  func.func @_tanh_dup4_kernel(%arg0: i32, %arg1: memref<32x128xf32, #tpu.memory_space<vmem>>, %arg2: memref<4x32x128xf32, #tpu.memory_space<vmem>>) attributes {dimension_semantics = [#tpu.dimension_semantics<parallel>], iteration_bounds = array<i64: 2>, scalar_prefetch = 0 : i64, scratch_operands = 0 : i64, tpu.core_type = #tpu.core_type<tc>, window_params = [{transform_indices = @transform_0, window_bounds = array<i64: 32, 128>}, {transform_indices = @transform_1, window_bounds = array<i64: 4, 32, 128>}]} {
    %c0 = arith.constant 0 : index
    %c0_0 = arith.constant 0 : index
    %0 = vector.load %arg1[%c0, %c0_0] : memref<32x128xf32, #tpu.memory_space<vmem>>, vector<32x128xf32>
    %1 = math.tanh %0 : vector<32x128xf32>
    %2 = math.tanh %1 : vector<32x128xf32>
    %c0_1 = arith.constant 0 : index
    %c0_2 = arith.constant 0 : index
    %c0_3 = arith.constant 0 : index
    %3 = vector.load %arg2[%c0_1, %c0_2, %c0_3] : memref<4x32x128xf32, #tpu.memory_space<vmem>>, vector<1x32x128xf32>
    %4 = vector.shape_cast %3 : vector<1x32x128xf32> to vector<32x128xf32>
    %5 = vector.shape_cast %2 : vector<32x128xf32> to vector<1x32x128xf32>
    tpu.vector_store %arg2[%c0_1, %c0_2, %c0_3], %5 {strides = array<i32>} : memref<4x32x128xf32, #tpu.memory_space<vmem>>, vector<1x32x128xf32>,
    %c1 = arith.constant 1 : index
    %c0_4 = arith.constant 0 : index
    %c0_5 = arith.constant 0 : index
    %6 = vector.load %arg2[%c1, %c0_4, %c0_5] : memref<4x32x128xf32, #tpu.memory_space<vmem>>, vector<1x32x128xf32>
    %7 = vector.shape_cast %6 : vector<1x32x128xf32> to vector<32x128xf32>
    %8 = vector.shape_cast %2 : vector<32x128xf32> to vector<1x32x128xf32>
    tpu.vector_store %arg2[%c1, %c0_4, %c0_5], %8 {strides = array<i32>} : memref<4x32x128xf32, #tpu.memory_space<vmem>>, vector<1x32x128xf32>,
    %c2 = arith.constant 2 : index
    %c0_6 = arith.constant 0 : index
    %c0_7 = arith.constant 0 : index
    %9 = vector.load %arg2[%c2, %c0_6, %c0_7] : memref<4x32x128xf32, #tpu.memory_space<vmem>>, vector<1x32x128xf32>
    %10 = vector.shape_cast %9 : vector<1x32x128xf32> to vector<32x128xf32>
    %11 = vector.shape_cast %2 : vector<32x128xf32> to vector<1x32x128xf32>
    tpu.vector_store %arg2[%c2, %c0_6, %c0_7], %11 {strides = array<i32>} : memref<4x32x128xf32, #tpu.memory_space<vmem>>, vector<1x32x128xf32>,
    %c3 = arith.constant 3 : index
    %c0_8 = arith.constant 0 : index
    %c0_9 = arith.constant 0 : index
    %12 = vector.load %arg2[%c3, %c0_8, %c0_9] : memref<4x32x128xf32, #tpu.memory_space<vmem>>, vector<1x32x128xf32>
    %13 = vector.shape_cast %12 : vector<1x32x128xf32> to vector<32x128xf32>
    %14 = vector.shape_cast %2 : vector<32x128xf32> to vector<1x32x128xf32>
    tpu.vector_store %arg2[%c3, %c0_8, %c0_9], %14 {strides = array<i32>} : memref<4x32x128xf32, #tpu.memory_space<vmem>>, vector<1x32x128xf32>,
    return
  }
  func.func @transform_0(%arg0: i32) -> (i32, i32) {
    %c0_i32 = arith.constant 0 : i32
    %c0_i32_0 = arith.constant 0 : i32
    return %arg0, %c0_i32 : i32, i32
  }
  func.func @transform_1(%arg0: i32) -> (i32, i32, i32) {
    %c0_i32 = arith.constant 0 : i32
    %c0_i32_0 = arith.constant 0 : i32
    %c0_i32_1 = arith.constant 0 : i32
    return %c0_i32, %arg0, %c0_i32_0 : i32, i32, i32
  }
}

</mosaic_0001>

<llo_original>
// kernel: tpu_custom_call.1
$region0: #{tpu_custom_call.1}
  #allocation0 [shape = 'u32[]', space=smem, size = 0x4, offset = 0x4, fixed_abs, tag = 'smem constant byte address 0x4 - core index']
  #allocation1 [shape = 'u32[144,128]{1,0:T(1,128)}', space=vmem, size = 0x12000, scoped, tag = 'internal scratch']
  #allocation6 [shape = 's32[]', space=sflag, size = 0x4, offset = 0, fixed_abs, tag = 'sflag constant byte address 0x0 - dummy sync flag']
  %s0 = inlined_call_operand.hbm [shape: f32[64,128], index: 0, kind: input, shape index: {}]
  %s1 = inlined_call_operand.hbm [shape: f32[4,64,128], index: 1, kind: output, shape index: {}]
  %s2 = sld [smem:[#allocation0]]
  $region41: #{tpu_custom_call.1} parent=0
    _
  %s4 = ssub.s32 1, %s2
  %s5 = scalar_select 0, %s4, %s2
  $region1: #{tpu_custom_call.1} parent=0
    #allocation2 [shape = 'u8[32768]{0}', space=vmem, size = 0x8000, scoped, tag = 'input window, operand 0']
    #allocation3 [shape = 's32[2]{0}', space=sflag, size = 0x8, scoped, tag = 'scoped memory for tpu_custom_call.1']
    #allocation4 [shape = 's32[2]{0}', space=sflag, size = 0x8, scoped, tag = 'scoped memory for tpu_custom_call.1']
    #allocation5 [shape = 'u8[131072]{0}', space=vmem, size = 0x20000, scoped, tag = 'output window, operand 0']
    %6 = vsyncpa [#allocation3], 0
    %s7 = scalar_lea.sflag [#allocation3], 1
    %8 = vsyncpa %s7, 0
    %9 = vsyncpa [#allocation4], 0
    %s10 = scalar_lea.sflag [#allocation4], 1
    %11 = vsyncpa %s10, 0
    loop: start=0, step=1, limit=4
    $region2: #{tpu_custom_call.1} parent=1 // loop_pre_header
      _
    $region3: #{tpu_custom_call.1} parent=1 // loop_header
      %s13 = sphi 0, %s17
      %p14 = scmp.ge.s32.totalorder %s13, 4
      %s23 = sphi 0, %s25
      %s26 = sphi 0, %s23
      %s27 = sphi 0, %s26
      %s43 = sphi 0, %s27
      %s49 = sphi 0, %s51
      %s52 = sphi 0, %s49
      %s53 = sphi 0, %s52
      %s69 = sphi 0, %s53
    $region4: #{tpu_custom_call.1} parent=1 // loop_header_branch
      %16 = sbr.rel (%p14) target = $region8
    $region5: #{tpu_custom_call.1} parent=1 // loop_body
      %s18 = ssub.s32 %s13, 1
      %s19 = ssub.s32 %s13, 2
      %s20 = sadd.s32 %s13, 1
      %s21 = ssub.s32 %s13, %s20
      %p22 = scmp.eq.s32.totalorder %s21, 0
      %s24 = sadd.s32 %s23, 1
      %s25 = scalar_select %p22, %s23, %s24
      %p28 = pneg %p22
      %p29 = scmp.eq.s32.totalorder %s13, 1
      %p30 = por %p28, %p29
      %p31 = scmp.ne.s32.totalorder %s23, %s26
      %p32 = scmp.eq.s32.totalorder %s13, 0
      %p33 = por %p31, %p32
      %p34 = scmp.ne.s32.totalorder %s23, %s26
      %p35 = scmp.eq.s32.totalorder %s18, 1
      %p36 = por %p34, %p35
      %p37 = scmp.ne.s32.totalorder %s26, %s27
      %p38 = scmp.eq.s32.totalorder %s18, 0
      %p39 = por %p37, %p38
      %p40 = scmp.ne.s32.totalorder %s26, %s27
      %p41 = scmp.eq.s32.totalorder %s19, 1
      %p42 = por %p40, %p41
      %p44 = scmp.ne.s32.totalorder %s27, %s43
      %p45 = scmp.eq.s32.totalorder %s19, 0
      %p46 = por %p44, %p45
      %s47 = ssub.s32 %s13, %s20
      %p48 = scmp.eq.s32.totalorder %s47, 0
      %s50 = sadd.s32 %s49, 1
      %s51 = scalar_select %p48, %s49, %s50
      %p54 = pneg %p48
      %p55 = scmp.eq.s32.totalorder %s13, 1
      %p56 = por %p54, %p55
      %p57 = scmp.ne.s32.totalorder %s49, %s52
      %p58 = scmp.eq.s32.totalorder %s13, 0
      %p59 = por %p57, %p58
      %p60 = scmp.ne.s32.totalorder %s49, %s52
      %p61 = scmp.eq.s32.totalorder %s18, 1
      %p62 = por %p60, %p61
      %p63 = scmp.ne.s32.totalorder %s52, %s53
      %p64 = scmp.eq.s32.totalorder %s18, 0
      %p65 = por %p63, %p64
      %p66 = scmp.ne.s32.totalorder %s52, %s53
      %p67 = scmp.eq.s32.totalorder %s19, 1
      %p68 = por %p66, %p67
      %p70 = scmp.ne.s32.totalorder %s53, %s69
      %p71 = scmp.eq.s32.totalorder %s19, 0
      %p72 = por %p70, %p71
      %p73 = scmp.le.s32.totalorder 1, %s13
      %p74 = scmp.lt.s32.totalorder %s13, 3
      %p75 = pnand %p73, %p74
      %p76 = pneg %p75
      // Predicated region
      $region9: #{tpu_custom_call.1} parent=5 // pred_check
        _
      $region10: #{tpu_custom_call.1} parent=5 // pred_check_branch
        %78 = sbr.rel (%p75) target = $region12
      $region11: #{tpu_custom_call.1} parent=5 // pred_region
        %s79 = ssub.s32 %s13, 1
      $region12: #{tpu_custom_call.1} parent=5 // pred_fallthru
        _
      %p80 = scmp.lt.s32.totalorder %s13, 2
      // Predicated region
      $region13: #{tpu_custom_call.1} parent=5 // pred_check
        %p81 = pneg %p80
      $region14: #{tpu_custom_call.1} parent=5 // pred_check_branch
        %83 = sbr.rel (%p81) target = $region16
      $region15: #{tpu_custom_call.1} parent=5 // pred_region
        // Predicated region
        $region17: #{tpu_custom_call.1} parent=15 // pred_check
          %p84 = pneg %p33
        $region18: #{tpu_custom_call.1} parent=15 // pred_check_branch
          %86 = sbr.rel (%p84) target = $region20
        $region19: #{tpu_custom_call.1} parent=15 // pred_region
          %s87 = sand.u32 %s23, 1
          %s88 = scalar_lea.sflag [#allocation3], %s87
          %s89 = sand.u32 %s23, 1
          %s90 = smul.addr %s89, 32
          %s91 = scalar_lea.vmem [#allocation2], %s90
          %s92 = smul.u32 4, %s13
          %s94 = ssub.s32 512, 512
          %95 = vsyncadd %s88, %s94
          %s96 = smul.addr %s92, 128
          %s97 = scalar_lea.hbm %s0, %s96
          %s98 = sshll.u32 %s91, 4
          %s99 = int_to_ptr.vmem [resolvable:$true] %s98
          %104 = dma.hbm_to_vmem [thread:$0]  %s97, 512, %s99, %s88, 128, 128, 8
        $region20: #{tpu_custom_call.1} parent=15 // pred_fallthru
          _
      $region16: #{tpu_custom_call.1} parent=5 // pred_fallthru
        _
      %p105 = scmp.le.s32.totalorder 1, %s13
      %p106 = scmp.lt.s32.totalorder %s13, 3
      %p107 = pnand %p105, %p106
      %p108 = pneg %p107
      // Predicated region
      $region21: #{tpu_custom_call.1} parent=5 // pred_check
        _
      $region22: #{tpu_custom_call.1} parent=5 // pred_check_branch
        %110 = sbr.rel (%p107) target = $region24
      $region23: #{tpu_custom_call.1} parent=5 // pred_region
        %s111 = ssub.s32 %s13, 1
        %s112 = sand.u32 %s26, 1
        %s113 = scalar_lea.sflag [#allocation3], %s112
        %s114 = sand.u32 %s26, 1
        %s115 = smul.addr %s114, 32
        %s116 = scalar_lea.vmem [#allocation2], %s115
        // Predicated region
        $region25: #{tpu_custom_call.1} parent=23 // pred_check
          %p117 = pneg %p39
        $region26: #{tpu_custom_call.1} parent=23 // pred_check_branch
          %119 = sbr.rel (%p117) target = $region28
        $region27: #{tpu_custom_call.1} parent=23 // pred_region
          %120 = dma.done %s113, 512
        $region28: #{tpu_custom_call.1} parent=23 // pred_fallthru
          _
        %s121 = sand.u32 %s26, 1
        %s122 = scalar_lea.sflag [#allocation3], %s121
        %s123 = sand.u32 %s26, 1
        %s124 = smul.addr %s123, 32
        %s125 = scalar_lea.vmem [#allocation2], %s124
        %p126 = pneg %p39
        %p127 = pneg %p36
        %p128 = pneg %p65
        %p129 = pneg %p62
        %s130 = sand.u32 %s52, 1
        %s131 = scalar_lea.sflag [#allocation4], %s130
        %s132 = sand.u32 %s52, 1
        %s133 = smul.addr %s132, 128
        %s134 = scalar_lea.vmem [#allocation5], %s133
        %s135 = smul.u32 4, %s18
        %s136 = smul.u32 4, %s18
        %v137 = vld [vmem:[%s116] sm:$0xff]
        %v138 = vld [vmem:[%s116 + $0x8] sm:$0xff]
        %v139 = vld [vmem:[%s116 + $0x10] sm:$0xff]
        %v140 = vld [vmem:[%s116 + $0x18] sm:$0xff]
        %v141 = vtanh.pop %v137
        %v142 = vtanh.pop %v138
        %v143 = vtanh.pop %v139
        %v144 = vtanh.pop %v140
        %v145 = vtanh.pop %v141
        %v146 = vtanh.pop %v142
        %v147 = vtanh.pop %v143
        %v148 = vtanh.pop %v144
        %149 = vst [vmem:[%s134] sm:$0xff] %v145
        %150 = vst [vmem:[%s134 + $0x8] sm:$0xff] %v146
        %151 = vst [vmem:[%s134 + $0x10] sm:$0xff] %v147
        %152 = vst [vmem:[%s134 + $0x18] sm:$0xff] %v148
        %s153 = scalar_lea.vmem %s134, 32 [#allocation5]
        %154 = vst [vmem:[%s153] sm:$0xff] %v145
        %155 = vst [vmem:[%s153 + $0x8] sm:$0xff] %v146
        %156 = vst [vmem:[%s153 + $0x10] sm:$0xff] %v147
        %157 = vst [vmem:[%s153 + $0x18] sm:$0xff] %v148
        %s158 = scalar_lea.vmem %s134, 64 [#allocation5]
        %159 = vst [vmem:[%s158] sm:$0xff] %v145
        %160 = vst [vmem:[%s158 + $0x8] sm:$0xff] %v146
        %161 = vst [vmem:[%s158 + $0x10] sm:$0xff] %v147
        %162 = vst [vmem:[%s158 + $0x18] sm:$0xff] %v148
        %s163 = scalar_lea.vmem %s134, 96 [#allocation5]
        %164 = vst [vmem:[%s163] sm:$0xff] %v145
        %165 = vst [vmem:[%s163 + $0x8] sm:$0xff] %v146
        %166 = vst [vmem:[%s163 + $0x10] sm:$0xff] %v147
        %167 = vst [vmem:[%s163 + $0x18] sm:$0xff] %v148
        %s168 = sand.u32 %s52, 1
        %s169 = scalar_lea.sflag [#allocation4], %s168
        %s170 = sand.u32 %s52, 1
        %s171 = smul.addr %s170, 128
        %s172 = scalar_lea.vmem [#allocation5], %s171
        // Predicated region
        $region29: #{tpu_custom_call.1} parent=23 // pred_check
          %p173 = pneg %p62
        $region30: #{tpu_custom_call.1} parent=23 // pred_check_branch
          %175 = sbr.rel (%p173) target = $region32
        $region31: #{tpu_custom_call.1} parent=23 // pred_region
          #allocation7 [shape = 'u32[6]{0}', space=smem, size = 0x18, scoped, tag = 'DMA stride descriptor']
          %s176 = smul.u32 4, %s18
          %s178 = ssub.s32 2048, 2048
          %179 = vsyncadd %s169, %s178
          %s180 = smul.addr %s176, 128
          %s181 = scalar_lea.hbm %s1, %s180
          %s183 = sshll.u32 1, 14
          %s184 = sxor.u32 4294967295, %s183
          %s187 = sshll.u32 7, 18
          %s188 = sxor.u32 4294967295, %s187
          %s189 = sand.u32 0, %s188
          %s191 = sor.u32 %s189, 0
          %s192 = sshll.u32 %s172, 4
          %s193 = int_to_ptr.vmem [resolvable:$true] %s192
          %199 = sst [smem:[#allocation7]] 512
          %s200 = scalar_lea.smem [#allocation7], 1
          %201 = sst [smem:[%s200]] 1024
          %s202 = scalar_lea.smem [#allocation7], 2
          %203 = sst [smem:[%s202]] 4
          %s204 = scalar_lea.smem [#allocation7], 3
          %205 = sst [smem:[%s204]] 128
          %s206 = scalar_lea.smem [#allocation7], 4
          %207 = sst [smem:[%s206]] 128
          %s208 = scalar_lea.smem [#allocation7], 5
          %209 = sst [smem:[%s208]] 8
          %211 = dma.general %s193, 2048, %s181, %s169, 131072, [#allocation7], %s191, 0
        $region32: #{tpu_custom_call.1} parent=23 // pred_fallthru
          _
      $region24: #{tpu_custom_call.1} parent=5 // pred_fallthru
        _
      %p212 = scmp.le.s32.totalorder 2, %s13
      // Predicated region
      $region33: #{tpu_custom_call.1} parent=5 // pred_check
        %p213 = pneg %p212
      $region34: #{tpu_custom_call.1} parent=5 // pred_check_branch
        %215 = sbr.rel (%p213) target = $region36
      $region35: #{tpu_custom_call.1} parent=5 // pred_region
        %s216 = ssub.s32 %s13, 2
        // Predicated region
        $region37: #{tpu_custom_call.1} parent=35 // pred_check
          %p217 = pneg %p68
        $region38: #{tpu_custom_call.1} parent=35 // pred_check_branch
          %219 = sbr.rel (%p217) target = $region40
        $region39: #{tpu_custom_call.1} parent=35 // pred_region
          %s220 = sand.u32 %s53, 1
          %s221 = scalar_lea.sflag [#allocation4], %s220
          %s222 = sand.u32 %s53, 1
          %s223 = smul.addr %s222, 128
          %s224 = scalar_lea.vmem [#allocation5], %s223
          %225 = dma.done %s221, 2048
        $region40: #{tpu_custom_call.1} parent=35 // pred_fallthru
          _
      $region36: #{tpu_custom_call.1} parent=5 // pred_fallthru
        _
    $region6: #{tpu_custom_call.1} parent=1 // loop_footer
      %s17 = sadd.s32 1, %s13
    $region7: #{tpu_custom_call.1} parent=1 // loop_footer_branch
      %12 = sbr.rel target = $region3
    $region8: #{tpu_custom_call.1} parent=1 // loop_exit
      _
    %226 = vsyncpa [#allocation3], 1
    %s227 = scalar_lea.sflag [#allocation3], 1
    %228 = vsyncpa %s227, 1
    %229 = vsyncpa [#allocation4], 1
    %s230 = scalar_lea.sflag [#allocation4], 1
    %231 = vsyncpa %s230, 1

</llo_original>
